<compile_context>
chip_gen: v5e
topology: v5e:2x2
jax: 0.10.0
libtpu: 0.0.40
codegen_flags: <defaults>
</compile_context>

<pallas_src>
import jax
import jax.numpy as jnp
from jax.experimental import pallas as pl
from jax.experimental.pallas import tpu as pltpu


def _round_up(x, m):
    return (x + m - 1) // m * m


def _cdiv(a, b):
    return -(-a // b)


def mlp_kernel(x_ref, w1_ref, b1_ref, w2_ref, b2_ref, w3_ref, b3_ref, o_ref):
    # x arrives as f32 (tb, d_in); cast to bf16 in VMEM (no wrapper-side pad/cast pass).
    x = x_ref[...].astype(jnp.bfloat16)
    h1 = jnp.dot(x, w1_ref[...], preferred_element_type=jnp.float32)
    h1 = jnp.maximum(h1 + b1_ref[...], 0.0)
    h2 = jnp.dot(h1.astype(jnp.bfloat16), w2_ref[...],
                 preferred_element_type=jnp.float32)
    h2 = jnp.maximum(h2 + b2_ref[...], 0.0)
    y = jnp.dot(h2.astype(jnp.bfloat16), w3_ref[...],
                preferred_element_type=jnp.float32)
    o_ref[...] = (y + b3_ref[...]).astype(o_ref.dtype)


def init_params(key, input_size, hidden_units, output_size, dtype=jnp.float32):
    """Logical params matching nn.Linear shapes; weights stored as (in, out)."""
    dims = [input_size, hidden_units[0], hidden_units[1], output_size]
    params = {}
    for idx in range(3):
        key, kw, kb = jax.random.split(key, 3)
        fan_in, fan_out = dims[idx], dims[idx + 1]
        bound = 1.0 / (fan_in ** 0.5)  # same scale as torch.nn.Linear default init
        params[f"w{idx+1}"] = jax.random.uniform(
            kw, (fan_in, fan_out), dtype, minval=-bound, maxval=bound)
        params[f"b{idx+1}"] = jax.random.uniform(
            kb, (1, fan_out), dtype, minval=-bound, maxval=bound)
    return params


def prepare_params(params):
    """One-time bf16 cast of weights (MXU operands). Biases stay f32. No padding."""
    return {
        "w1": params["w1"].astype(jnp.bfloat16),
        "b1": params["b1"].astype(jnp.float32),
        "w2": params["w2"].astype(jnp.bfloat16),
        "b2": params["b2"].astype(jnp.float32),
        "w3": params["w3"].astype(jnp.bfloat16),
        "b3": params["b3"].astype(jnp.float32),
    }


def _pick_tb(B):
    """Batch tile: >=2 blocks for megacore when B >= 32, big tiles for big batches,
    and a nearly-full last tile so batch padding waste stays small."""
    if B < 32:
        return _round_up(max(B, 8), 8)          # tiny batch: single tile
    if B < 256:
        return _round_up(_cdiv(B, 2), 16)       # 2 blocks -> v7x second TC gets work
    if B >= 4096:
        target = 2048
    elif B >= 2048:
        target = 1024
    elif B >= 1024:
        target = 512
    elif B >= 512:
        target = 256
    else:
        target = 128
    nblocks = _cdiv(B, target)
    return _round_up(_cdiv(B, nblocks), 16)     # last tile nearly full


def simple_nn_forward(x, prepped, *, tb=None):
    """Fused MLP forward. x: (B, input_size) f32. prepped: output of prepare_params."""
    B, d_in = x.shape
    h1 = prepped["w1"].shape[1]
    h2 = prepped["w2"].shape[1]
    d_out = prepped["w3"].shape[1]

    if tb is None:
        tb = _pick_tb(B)
    tb = max(8, _round_up(tb, 8))
    B_pad = _round_up(B, tb)
    if B_pad != B:
        x = jnp.pad(x, ((0, B_pad - B), (0, 0)))  # only for ragged batches
    grid = (B_pad // tb,)

    # Honest VMEM budget: double-buffered x / out tiles, f32 intermediates, resident weights.
    w_bytes = sum(int(prepped[k].size) * prepped[k].dtype.itemsize
                  for k in ("w1", "b1", "w2", "b2", "w3", "b3"))
    est = (2 * tb * d_in * 4 + 2 * tb * d_out * 4
           + 2 * tb * (h1 + h2) * 4 + 2 * w_bytes)
    vmem_limit = int(min(64 * 1024 * 1024, max(4 * 1024 * 1024, 2 * est)))

    out = pl.pallas_call(
        mlp_kernel,
        out_shape=jax.ShapeDtypeStruct((B_pad, d_out), jnp.float32),
        grid_spec=pl.GridSpec(
            grid=grid,
            in_specs=[
                pl.BlockSpec((tb, d_in), lambda i: (i, 0)),    # x tile (streams)
                pl.BlockSpec((d_in, h1), lambda i: (0, 0)),    # w1 (resident)
                pl.BlockSpec((1, h1), lambda i: (0, 0)),       # b1
                pl.BlockSpec((h1, h2), lambda i: (0, 0)),      # w2 (resident)
                pl.BlockSpec((1, h2), lambda i: (0, 0)),       # b2
                pl.BlockSpec((h2, d_out), lambda i: (0, 0)),   # w3 (resident)
                pl.BlockSpec((1, d_out), lambda i: (0, 0)),    # b3
            ],
            out_specs=pl.BlockSpec((tb, d_out), lambda i: (i, 0)),
        ),
        compiler_params=pltpu.CompilerParams(
            dimension_semantics=("parallel",),
            vmem_limit_bytes=vmem_limit,
        ),
    )(x, prepped["w1"], prepped["b1"], prepped["w2"], prepped["b2"],
      prepped["w3"], prepped["b3"])

    return out[:B] if B_pad != B else out


if __name__ == "__main__":
    # Shapes consistent with SimpleNN(input_size=32, hidden_units=[64, 48], output_size=16).
    # batch=256 gives a 2-block grid, exercising the pipelined / megacore path.
    batch = 256
    input_size = 32
    hidden_units = [64, 48]
    output_size = 16

    key = jax.random.PRNGKey(0)
    key, kx = jax.random.split(key)
    x = jax.random.normal(kx, (batch, input_size), dtype=jnp.float32)
    params = init_params(key, input_size, hidden_units, output_size)
    prepped = prepare_params(params)

    out = simple_nn_forward(x, prepped)
    out = jax.block_until_ready(out)

    # Reference in f32 using the same bf16-stored weights the kernel consumes
    # (remaining error comes only from the in-kernel bf16 casts of x / h1 / h2).
    w1f = prepped["w1"].astype(jnp.float32)
    w2f = prepped["w2"].astype(jnp.float32)
    w3f = prepped["w3"].astype(jnp.float32)
    ref = jnp.maximum(x @ w1f + prepped["b1"], 0.0)
    ref = jnp.maximum(ref @ w2f + prepped["b2"], 0.0)
    ref = ref @ w3f + prepped["b3"]

    assert out.shape == (batch, output_size)
    max_err = float(jnp.max(jnp.abs(out - ref)))
    assert jnp.allclose(out, ref, atol=2e-2, rtol=2e-2), max_err

    print("KERNEL_OK")
</pallas_src>

<mosaic_0001>
module attributes {stable_mosaic.version = 11 : i64} {
  func.func @mlp_kernel(%arg0: i32, %arg1: memref<128x32xf32, #tpu.memory_space<vmem>>, %arg2: memref<32x64xbf16, #tpu.memory_space<vmem>>, %arg3: memref<1x64xf32, #tpu.memory_space<vmem>>, %arg4: memref<64x48xbf16, #tpu.memory_space<vmem>>, %arg5: memref<1x48xf32, #tpu.memory_space<vmem>>, %arg6: memref<48x16xbf16, #tpu.memory_space<vmem>>, %arg7: memref<1x16xf32, #tpu.memory_space<vmem>>, %arg8: memref<128x16xf32, #tpu.memory_space<vmem>>) attributes {dimension_semantics = [#tpu.dimension_semantics<parallel>], iteration_bounds = array<i64: 2>, scalar_prefetch = 0 : i64, scratch_operands = 0 : i64, tpu.core_type = #tpu.core_type<tc>, window_params = [{transform_indices = @transform_0, window_bounds = array<i64: 128, 32>}, {pipeline_mode = #tpu.pipeline_mode<synchronous>, transform_indices = @transform_1, window_bounds = array<i64: 32, 64>}, {pipeline_mode = #tpu.pipeline_mode<synchronous>, transform_indices = @transform_2, window_bounds = array<i64: 1, 64>}, {pipeline_mode = #tpu.pipeline_mode<synchronous>, transform_indices = @transform_3, window_bounds = array<i64: 64, 48>}, {pipeline_mode = #tpu.pipeline_mode<synchronous>, transform_indices = @transform_4, window_bounds = array<i64: 1, 48>}, {pipeline_mode = #tpu.pipeline_mode<synchronous>, transform_indices = @transform_5, window_bounds = array<i64: 48, 16>}, {pipeline_mode = #tpu.pipeline_mode<synchronous>, transform_indices = @transform_6, window_bounds = array<i64: 1, 16>}, {transform_indices = @transform_7, window_bounds = array<i64: 128, 16>}]} {
    %c0 = arith.constant 0 : index
    %c0_0 = arith.constant 0 : index
    %0 = vector.load %arg1[%c0, %c0_0] : memref<128x32xf32, #tpu.memory_space<vmem>>, vector<128x32xf32>
    %1 = arith.truncf %0 : vector<128x32xf32> to vector<128x32xbf16>
    %c0_1 = arith.constant 0 : index
    %c0_2 = arith.constant 0 : index
    %2 = vector.load %arg2[%c0_1, %c0_2] : memref<32x64xbf16, #tpu.memory_space<vmem>>, vector<32x64xbf16>
    %cst = arith.constant dense<0.000000e+00> : vector<128x64xf32>
    %3 = tpu.matmul %1, %2, %cst {dimension_numbers = #tpu.dot_dimension_numbers<[1], [0], [0], [1], [0, 0, 1, 1], [], []>} : vector<128x32xbf16>, vector<32x64xbf16>, vector<128x64xf32> -> vector<128x64xf32>
    %c0_3 = arith.constant 0 : index
    %c0_4 = arith.constant 0 : index
    %4 = vector.load %arg3[%c0_3, %c0_4] : memref<1x64xf32, #tpu.memory_space<vmem>>, vector<1x64xf32>
    %5 = vector.broadcast %4 : vector<1x64xf32> to vector<128x64xf32>
    %6 = arith.addf %3, %5 : vector<128x64xf32>
    %cst_5 = arith.constant 0.000000e+00 : f32
    %7 = vector.broadcast %cst_5 : f32 to vector<128x64xf32>
    %8 = arith.maximumf %6, %7 : vector<128x64xf32>
    %9 = arith.truncf %8 : vector<128x64xf32> to vector<128x64xbf16>
    %c0_6 = arith.constant 0 : index
    %c0_7 = arith.constant 0 : index
    %10 = vector.load %arg4[%c0_6, %c0_7] : memref<64x48xbf16, #tpu.memory_space<vmem>>, vector<64x48xbf16>
    %cst_8 = arith.constant dense<0.000000e+00> : vector<128x48xf32>
    %11 = tpu.matmul %9, %10, %cst_8 {dimension_numbers = #tpu.dot_dimension_numbers<[1], [0], [0], [1], [0, 0, 1, 1], [], []>} : vector<128x64xbf16>, vector<64x48xbf16>, vector<128x48xf32> -> vector<128x48xf32>
    %c0_9 = arith.constant 0 : index
    %c0_10 = arith.constant 0 : index
    %12 = vector.load %arg5[%c0_9, %c0_10] : memref<1x48xf32, #tpu.memory_space<vmem>>, vector<1x48xf32>
    %13 = vector.broadcast %12 : vector<1x48xf32> to vector<128x48xf32>
    %14 = arith.addf %11, %13 : vector<128x48xf32>
    %cst_11 = arith.constant 0.000000e+00 : f32
    %15 = vector.broadcast %cst_11 : f32 to vector<128x48xf32>
    %16 = arith.maximumf %14, %15 : vector<128x48xf32>
    %17 = arith.truncf %16 : vector<128x48xf32> to vector<128x48xbf16>
    %c0_12 = arith.constant 0 : index
    %c0_13 = arith.constant 0 : index
    %18 = vector.load %arg6[%c0_12, %c0_13] : memref<48x16xbf16, #tpu.memory_space<vmem>>, vector<48x16xbf16>
    %cst_14 = arith.constant dense<0.000000e+00> : vector<128x16xf32>
    %19 = tpu.matmul %17, %18, %cst_14 {dimension_numbers = #tpu.dot_dimension_numbers<[1], [0], [0], [1], [0, 0, 1, 1], [], []>} : vector<128x48xbf16>, vector<48x16xbf16>, vector<128x16xf32> -> vector<128x16xf32>
    %c0_15 = arith.constant 0 : index
    %c0_16 = arith.constant 0 : index
    %20 = vector.load %arg7[%c0_15, %c0_16] : memref<1x16xf32, #tpu.memory_space<vmem>>, vector<1x16xf32>
    %21 = vector.broadcast %20 : vector<1x16xf32> to vector<128x16xf32>
    %22 = arith.addf %19, %21 : vector<128x16xf32>
    %c0_17 = arith.constant 0 : index
    %c0_18 = arith.constant 0 : index
    %23 = vector.load %arg8[%c0_17, %c0_18] : memref<128x16xf32, #tpu.memory_space<vmem>>, vector<128x16xf32>
    tpu.vector_store %arg8[%c0_17, %c0_18], %22 {strides = array<i32>} : memref<128x16xf32, #tpu.memory_space<vmem>>, vector<128x16xf32>,
    return
  }
  func.func @transform_0(%arg0: i32) -> (i32, i32) {
    %c0_i32 = arith.constant 0 : i32
    %c0_i32_0 = arith.constant 0 : i32
    return %arg0, %c0_i32 : i32, i32
  }
  func.func @transform_1(%arg0: i32) -> (i32, i32) {
    %c0_i32 = arith.constant 0 : i32
    %c0_i32_0 = arith.constant 0 : i32
    %c0_i32_1 = arith.constant 0 : i32
    return %c0_i32, %c0_i32_0 : i32, i32
  }
  func.func @transform_2(%arg0: i32) -> (i32, i32) {
    %c0_i32 = arith.constant 0 : i32
    %c0_i32_0 = arith.constant 0 : i32
    %c0_i32_1 = arith.constant 0 : i32
    return %c0_i32, %c0_i32_0 : i32, i32
  }
  func.func @transform_3(%arg0: i32) -> (i32, i32) {
    %c0_i32 = arith.constant 0 : i32
    %c0_i32_0 = arith.constant 0 : i32
    %c0_i32_1 = arith.constant 0 : i32
    return %c0_i32, %c0_i32_0 : i32, i32
  }
  func.func @transform_4(%arg0: i32) -> (i32, i32) {
    %c0_i32 = arith.constant 0 : i32
    %c0_i32_0 = arith.constant 0 : i32
    %c0_i32_1 = arith.constant 0 : i32
    return %c0_i32, %c0_i32_0 : i32, i32
  }
  func.func @transform_5(%arg0: i32) -> (i32, i32) {
    %c0_i32 = arith.constant 0 : i32
    %c0_i32_0 = arith.constant 0 : i32
    %c0_i32_1 = arith.constant 0 : i32
    return %c0_i32, %c0_i32_0 : i32, i32
  }
  func.func @transform_6(%arg0: i32) -> (i32, i32) {
    %c0_i32 = arith.constant 0 : i32
    %c0_i32_0 = arith.constant 0 : i32
    %c0_i32_1 = arith.constant 0 : i32
    return %c0_i32, %c0_i32_0 : i32, i32
  }
  func.func @transform_7(%arg0: i32) -> (i32, i32) {
    %c0_i32 = arith.constant 0 : i32
    %c0_i32_0 = arith.constant 0 : i32
    return %arg0, %c0_i32 : i32, i32
  }
}

</mosaic_0001>

<llo_original>
// kernel: tpu_custom_call.1
$region0: #{tpu_custom_call.1}
  #allocation0 [shape = 'u32[]', space=smem, size = 0x4, offset = 0x4, fixed_abs, tag = 'smem constant byte address 0x4 - core index']
  #allocation1 [shape = 'u32[72,128]{1,0:T(1,128)}', space=vmem, size = 0x9000, scoped, tag = 'internal scratch']
  %s0 = inlined_call_operand.vmem [shape: f32[256,32], index: 0, kind: input, shape index: {}]
  %s1 = inlined_call_operand.vmem [shape: bf16[32,64], index: 1, kind: input, shape index: {}]
  %s2 = inlined_call_operand.vmem [shape: f32[1,64], index: 2, kind: input, shape index: {}]
  %s3 = inlined_call_operand.vmem [shape: bf16[64,48], index: 3, kind: input, shape index: {}]
  %s4 = inlined_call_operand.vmem [shape: f32[1,48], index: 4, kind: input, shape index: {}]
  %s5 = inlined_call_operand.vmem [shape: bf16[48,16], index: 5, kind: input, shape index: {}]
  %s6 = inlined_call_operand.vmem [shape: f32[1,16], index: 6, kind: input, shape index: {}]
  %s7 = inlined_call_operand.vmem [shape: f32[256,16], index: 7, kind: output, shape index: {}]
  %s8 = sld [smem:[#allocation0]]
  $region61: #{tpu_custom_call.1} parent=0
    _
  %s10 = ssub.s32 1, %s8
  %s11 = scalar_select 0, %s10, %s8
  loop: start=0, step=1, limit=4
  $region2: #{tpu_custom_call.1} parent=0 // loop_pre_header
    _
  $region3: #{tpu_custom_call.1} parent=0 // loop_header
    %s13 = sphi 0, %s17
    %p14 = scmp.ge.s32.totalorder %s13, 4
    %s23 = sphi 0, %s25
    %s26 = sphi 0, %s23
    %s27 = sphi 0, %s26
    %s43 = sphi 0, %s27
    %s47 = sphi 0, %s47
    %s49 = sphi 0, %s47
    %s50 = sphi 0, %s49
    %s64 = sphi 0, %s50
    %s68 = sphi 0, %s68
    %s70 = sphi 0, %s68
    %s71 = sphi 0, %s70
    %s85 = sphi 0, %s71
    %s89 = sphi 0, %s89
    %s91 = sphi 0, %s89
    %s92 = sphi 0, %s91
    %s106 = sphi 0, %s92
    %s110 = sphi 0, %s110
    %s112 = sphi 0, %s110
    %s113 = sphi 0, %s112
    %s127 = sphi 0, %s113
    %s131 = sphi 0, %s131
    %s133 = sphi 0, %s131
    %s134 = sphi 0, %s133
    %s148 = sphi 0, %s134
    %s152 = sphi 0, %s152
    %s154 = sphi 0, %s152
    %s155 = sphi 0, %s154
    %s169 = sphi 0, %s155
    %s175 = sphi 0, %s177
    %s178 = sphi 0, %s175
    %s179 = sphi 0, %s178
    %s195 = sphi 0, %s179
  $region4: #{tpu_custom_call.1} parent=0 // loop_header_branch
    %16 = sbr.rel (%p14) target = $region8
  $region5: #{tpu_custom_call.1} parent=0 // loop_body
    %s18 = ssub.s32 %s13, 1
    %s19 = ssub.s32 %s13, 2
    %s20 = sadd.s32 %s13, 1
    %s21 = ssub.s32 %s13, %s20
    %p22 = scmp.eq.s32.totalorder %s21, 0
    %s24 = sadd.s32 %s23, 1
    %s25 = scalar_select %p22, %s23, %s24
    %p28 = pneg %p22
    %p29 = scmp.eq.s32.totalorder %s13, 1
    %p30 = por %p28, %p29
    %p31 = scmp.ne.s32.totalorder %s23, %s26
    %p32 = scmp.eq.s32.totalorder %s13, 0
    %p33 = por %p31, %p32
    %p34 = scmp.ne.s32.totalorder %s23, %s26
    %p35 = scmp.eq.s32.totalorder %s18, 1
    %p36 = por %p34, %p35
    %p37 = scmp.ne.s32.totalorder %s26, %s27
    %p38 = scmp.eq.s32.totalorder %s18, 0
    %p39 = por %p37, %p38
    %p40 = scmp.ne.s32.totalorder %s26, %s27
    %p41 = scmp.eq.s32.totalorder %s19, 1
    %p42 = por %p40, %p41
    %p44 = scmp.ne.s32.totalorder %s27, %s43
    %p45 = scmp.eq.s32.totalorder %s19, 0
    %p46 = por %p44, %p45
    %s48 = sadd.s32 %s47, 1
    %p51 = scmp.eq.s32.totalorder %s13, 1
    %p52 = scmp.ne.s32.totalorder %s47, %s49
    %p53 = scmp.eq.s32.totalorder %s13, 0
    %p54 = por %p52, %p53
    %p55 = scmp.ne.s32.totalorder %s47, %s49
    %p56 = scmp.eq.s32.totalorder %s18, 1
    %p57 = por %p55, %p56
    %p58 = scmp.ne.s32.totalorder %s49, %s50
    %p59 = scmp.eq.s32.totalorder %s18, 0
    %p60 = por %p58, %p59
    %p61 = scmp.ne.s32.totalorder %s49, %s50
    %p62 = scmp.eq.s32.totalorder %s19, 1
    %p63 = por %p61, %p62
    %p65 = scmp.ne.s32.totalorder %s50, %s64
    %p66 = scmp.eq.s32.totalorder %s19, 0
    %p67 = por %p65, %p66
    %s69 = sadd.s32 %s68, 1
    %p72 = scmp.eq.s32.totalorder %s13, 1
    %p73 = scmp.ne.s32.totalorder %s68, %s70
    %p74 = scmp.eq.s32.totalorder %s13, 0
    %p75 = por %p73, %p74
    %p76 = scmp.ne.s32.totalorder %s68, %s70
    %p77 = scmp.eq.s32.totalorder %s18, 1
    %p78 = por %p76, %p77
    %p79 = scmp.ne.s32.totalorder %s70, %s71
    %p80 = scmp.eq.s32.totalorder %s18, 0
    %p81 = por %p79, %p80
    %p82 = scmp.ne.s32.totalorder %s70, %s71
    %p83 = scmp.eq.s32.totalorder %s19, 1
    %p84 = por %p82, %p83
    %p86 = scmp.ne.s32.totalorder %s71, %s85
    %p87 = scmp.eq.s32.totalorder %s19, 0
    %p88 = por %p86, %p87
    %s90 = sadd.s32 %s89, 1
    %p93 = scmp.eq.s32.totalorder %s13, 1
    %p94 = scmp.ne.s32.totalorder %s89, %s91
    %p95 = scmp.eq.s32.totalorder %s13, 0
    %p96 = por %p94, %p95
    %p97 = scmp.ne.s32.totalorder %s89, %s91
    %p98 = scmp.eq.s32.totalorder %s18, 1
    %p99 = por %p97, %p98
    %p100 = scmp.ne.s32.totalorder %s91, %s92
    %p101 = scmp.eq.s32.totalorder %s18, 0
    %p102 = por %p100, %p101
    %p103 = scmp.ne.s32.totalorder %s91, %s92
    %p104 = scmp.eq.s32.totalorder %s19, 1
    %p105 = por %p103, %p104
    %p107 = scmp.ne.s32.totalorder %s92, %s106
    %p108 = scmp.eq.s32.totalorder %s19, 0
    %p109 = por %p107, %p108
    %s111 = sadd.s32 %s110, 1
    %p114 = scmp.eq.s32.totalorder %s13, 1
    %p115 = scmp.ne.s32.totalorder %s110, %s112
    %p116 = scmp.eq.s32.totalorder %s13, 0
    %p117 = por %p115, %p116
    %p118 = scmp.ne.s32.totalorder %s110, %s112
    %p119 = scmp.eq.s32.totalorder %s18, 1
    %p120 = por %p118, %p119
    %p121 = scmp.ne.s32.totalorder %s112, %s113
    %p122 = scmp.eq.s32.totalorder %s18, 0
    %p123 = por %p121, %p122
    %p124 = scmp.ne.s32.totalorder %s112, %s113
    %p125 = scmp.eq.s32.totalorder %s19, 1
    %p126 = por %p124, %p125
    %p128 = scmp.ne.s32.totalorder %s113, %s127
    %p129 = scmp.eq.s32.totalorder %s19, 0
    %p130 = por %p128, %p129
    %s132 = sadd.s32 %s131, 1
    %p135 = scmp.eq.s32.totalorder %s13, 1
    %p136 = scmp.ne.s32.totalorder %s131, %s133
    %p137 = scmp.eq.s32.totalorder %s13, 0
    %p138 = por %p136, %p137
    %p139 = scmp.ne.s32.totalorder %s131, %s133
    %p140 = scmp.eq.s32.totalorder %s18, 1
    %p141 = por %p139, %p140
    %p142 = scmp.ne.s32.totalorder %s133, %s134
    %p143 = scmp.eq.s32.totalorder %s18, 0
    %p144 = por %p142, %p143
    %p145 = scmp.ne.s32.totalorder %s133, %s134
    %p146 = scmp.eq.s32.totalorder %s19, 1
    %p147 = por %p145, %p146
    %p149 = scmp.ne.s32.totalorder %s134, %s148
    %p150 = scmp.eq.s32.totalorder %s19, 0
    %p151 = por %p149, %p150
    %s153 = sadd.s32 %s152, 1
    %p156 = scmp.eq.s32.totalorder %s13, 1
    %p157 = scmp.ne.s32.totalorder %s152, %s154
    %p158 = scmp.eq.s32.totalorder %s13, 0
    %p159 = por %p157, %p158
    %p160 = scmp.ne.s32.totalorder %s152, %s154
    %p161 = scmp.eq.s32.totalorder %s18, 1
    %p162 = por %p160, %p161
    %p163 = scmp.ne.s32.totalorder %s154, %s155
    %p164 = scmp.eq.s32.totalorder %s18, 0
    %p165 = por %p163, %p164
    %p166 = scmp.ne.s32.totalorder %s154, %s155
    %p167 = scmp.eq.s32.totalorder %s19, 1
    %p168 = por %p166, %p167
    %p170 = scmp.ne.s32.totalorder %s155, %s169
    %p171 = scmp.eq.s32.totalorder %s19, 0
    %p172 = por %p170, %p171
    %s173 = ssub.s32 %s13, %s20
    %p174 = scmp.eq.s32.totalorder %s173, 0
    %s176 = sadd.s32 %s175, 1
    %s177 = scalar_select %p174, %s175, %s176
    %p180 = pneg %p174
    %p181 = scmp.eq.s32.totalorder %s13, 1
    %p182 = por %p180, %p181
    %p183 = scmp.ne.s32.totalorder %s175, %s178
    %p184 = scmp.eq.s32.totalorder %s13, 0
    %p185 = por %p183, %p184
    %p186 = scmp.ne.s32.totalorder %s175, %s178
    %p187 = scmp.eq.s32.totalorder %s18, 1
    %p188 = por %p186, %p187
    %p189 = scmp.ne.s32.totalorder %s178, %s179
    %p190 = scmp.eq.s32.totalorder %s18, 0
    %p191 = por %p189, %p190
    %p192 = scmp.ne.s32.totalorder %s178, %s179
    %p193 = scmp.eq.s32.totalorder %s19, 1
    %p194 = por %p192, %p193
    %p196 = scmp.ne.s32.totalorder %s179, %s195
    %p197 = scmp.eq.s32.totalorder %s19, 0
    %p198 = por %p196, %p197
    %p199 = scmp.le.s32.totalorder 1, %s13
    %p200 = scmp.lt.s32.totalorder %s13, 3
    %p201 = pnand %p199, %p200
    %p202 = pneg %p201
    // Predicated region
    $region9: #{tpu_custom_call.1} parent=5 // pred_check
      _
    $region10: #{tpu_custom_call.1} parent=5 // pred_check_branch
      %204 = sbr.rel (%p201) target = $region12
    $region11: #{tpu_custom_call.1} parent=5 // pred_region
      %s205 = ssub.s32 %s13, 1
      // Predicated region
      $region13: #{tpu_custom_call.1} parent=11 // pred_check
        %p206 = pneg %p60
      $region14: #{tpu_custom_call.1} parent=11 // pred_check_branch
        %208 = sbr.rel (%p206) target = $region16
      $region15: #{tpu_custom_call.1} parent=11 // pred_region
        _
      $region16: #{tpu_custom_call.1} parent=11 // pred_fallthru
        _
      // Predicated region
      $region17: #{tpu_custom_call.1} parent=11 // pred_check
        %p209 = pneg %p81
      $region18: #{tpu_custom_call.1} parent=11 // pred_check_branch
        %211 = sbr.rel (%p209) target = $region20
      $region19: #{tpu_custom_call.1} parent=11 // pred_region
        _
      $region20: #{tpu_custom_call.1} parent=11 // pred_fallthru
        _
      // Predicated region
      $region21: #{tpu_custom_call.1} parent=11 // pred_check
        %p212 = pneg %p102
      $region22: #{tpu_custom_call.1} parent=11 // pred_check_branch
        %214 = sbr.rel (%p212) target = $region24
      $region23: #{tpu_custom_call.1} parent=11 // pred_region
        _
      $region24: #{tpu_custom_call.1} parent=11 // pred_fallthru
        _
      // Predicated region
      $region25: #{tpu_custom_call.1} parent=11 // pred_check
        %p215 = pneg %p123
      $region26: #{tpu_custom_call.1} parent=11 // pred_check_branch
        %217 = sbr.rel (%p215) target = $region28
      $region27: #{tpu_custom_call.1} parent=11 // pred_region
        _
      $region28: #{tpu_custom_call.1} parent=11 // pred_fallthru
        _
      // Predicated region
      $region29: #{tpu_custom_call.1} parent=11 // pred_check
        %p218 = pneg %p144
      $region30: #{tpu_custom_call.1} parent=11 // pred_check_branch
        %220 = sbr.rel (%p218) target = $region32
      $region31: #{tpu_custom_call.1} parent=11 // pred_region
        _
      $region32: #{tpu_custom_call.1} parent=11 // pred_fallthru
        _
      // Predicated region
      $region33: #{tpu_custom_call.1} parent=11 // pred_check
        %p221 = pneg %p165
      $region34: #{tpu_custom_call.1} parent=11 // pred_check_branch
        %223 = sbr.rel (%p221) target = $region36
      $region35: #{tpu_custom_call.1} parent=11 // pred_region
        _
      $region36: #{tpu_custom_call.1} parent=11 // pred_fallthru
        _
    $region12: #{tpu_custom_call.1} parent=5 // pred_fallthru
      _
    %p224 = scmp.lt.s32.totalorder %s13, 2
    // Predicated region
    $region37: #{tpu_custom_call.1} parent=5 // pred_check
      %p225 = pneg %p224
    $region38: #{tpu_custom_call.1} parent=5 // pred_check_branch
      %227 = sbr.rel (%p225) target = $region40
    $region39: #{tpu_custom_call.1} parent=5 // pred_region
      // Predicated region
      $region41: #{tpu_custom_call.1} parent=39 // pred_check
        %p228 = pneg %p33
      $region42: #{tpu_custom_call.1} parent=39 // pred_check_branch
        %230 = sbr.rel (%p228) target = $region44
      $region43: #{tpu_custom_call.1} parent=39 // pred_region
        %s231 = smul.u32 16, %s13
        %p232 = scmp.lt.s32.totalorder %s231, 31
        %s233 = scalar_select %p232, %s231, 31
        %s234 = smul.addr %s233, 8
        %s235 = scalar_lea.vmem %s0, %s234
        %s236 = smul.u32 16, %s13
      $region44: #{tpu_custom_call.1} parent=39 // pred_fallthru
        _
    $region40: #{tpu_custom_call.1} parent=5 // pred_fallthru
      _
    %p237 = scmp.le.s32.totalorder 1, %s13
    %p238 = scmp.lt.s32.totalorder %s13, 3
    %p239 = pnand %p237, %p238
    %p240 = pneg %p239
    // Predicated region
    $region45: #{tpu_custom_call.1} parent=5 // pred_check
      _
    $region46: #{tpu_custom_call.1} parent=5 // pred_check_branch
      %242 = sbr.rel (%p239) target = $region48
    $region47: #{tpu_custom_call.1} parent=5 // pred_region
      %s243 = ssub.s32 %s13, 1
      %s244 = smul.u32 16, %s18
      %p245 = scmp.lt.s32.totalorder %s244, 31
      %s246 = scalar_select %p245, %s244, 31
      %s247 = smul.addr %s246, 8
      %s248 = scalar_lea.vmem %s0, %s247
      %p249 = pneg %p39
      %p250 = pneg %p36
      %p251 = pneg %p60
      %p252 = pneg %p57
      %p253 = pneg %p81
      %p254 = pneg %p78
      %p255 = pneg %p102
      %p256 = pneg %p99
      %p257 = pneg %p123
      %p258 = pneg %p120
      %p259 = pneg %p144
      %p260 = pneg %p141
      %p261 = pneg %p165
      %p262 = pneg %p162
      %p263 = pneg %p191
      %p264 = pneg %p188
      %s265 = smul.u32 16, %s18
      %p266 = scmp.lt.s32.totalorder %s265, 31
      %s267 = scalar_select %p266, %s265, 31
      %s268 = smul.addr %s267, 8
      %s269 = scalar_lea.vmem %s7, %s268
      %s270 = smul.u32 16, %s18
      %p271 = scmp.lt.s32.totalorder %s270, 31
      %s272 = scalar_select %p271, %s270, 31
      %s273 = smul.addr %s272, 8
      %s274 = scalar_lea.vmem %s0, %s273
      %s275 = smul.u32 16, %s18
      %s276 = smul.u32 16, %s18
      %p277 = scmp.lt.s32.totalorder %s276, 31
      %s278 = scalar_select %p277, %s276, 31
      %s279 = smul.addr %s278, 8
      %s280 = scalar_lea.vmem %s7, %s279
      %s281 = smul.u32 16, %s18
      %v283 = vld [vmem:[%s274] sm:$0xff]
      %v284 = vld [vmem:[%s274 + $0x8] sm:$0xff]
      %v285 = vld [vmem:[%s274 + $0x10] sm:$0xff]
      %v286 = vld [vmem:[%s274 + $0x18] sm:$0xff]
      %v287 = vld [vmem:[%s274 + $0x20] sm:$0xff]
      %v288 = vld [vmem:[%s274 + $0x28] sm:$0xff]
      %v289 = vld [vmem:[%s274 + $0x30] sm:$0xff]
      %v290 = vld [vmem:[%s274 + $0x38] sm:$0xff]
      %v291 = vld [vmem:[%s274 + $0x40] sm:$0xff]
      %v292 = vld [vmem:[%s274 + $0x48] sm:$0xff]
      %v293 = vld [vmem:[%s274 + $0x50] sm:$0xff]
      %v294 = vld [vmem:[%s274 + $0x58] sm:$0xff]
      %v295 = vld [vmem:[%s274 + $0x60] sm:$0xff]
      %v296 = vld [vmem:[%s274 + $0x68] sm:$0xff]
      %v297 = vld [vmem:[%s274 + $0x70] sm:$0xff]
      %v298 = vld [vmem:[%s274 + $0x78] sm:$0xff]
      %v299 = vpack.c.bf16 %v284, %v283
      %v300 = vpack.c.bf16 %v286, %v285
      %v301 = vpack.c.bf16 %v288, %v287
      %v302 = vpack.c.bf16 %v290, %v289
      %v303 = vpack.c.bf16 %v292, %v291
      %v304 = vpack.c.bf16 %v294, %v293
      %v305 = vpack.c.bf16 %v296, %v295
      %v306 = vpack.c.bf16 %v298, %v297
      %v307 = vld [vmem:[%s1] sm:$0xf]
      %v308 = vld [vmem:[%s1 + $0x4] sm:$0xf]
      %v309 = vld [vmem:[%s1 + $0x8] sm:$0xf]
      %v310 = vld [vmem:[%s1 + $0xc] sm:$0xf]
      %v311 = vld [vmem:[%s2] sm:$0x1]
      %v313 = vperm.slane %v311, 0
      %v319 = vunpack.c.l.b16 %v307
      %v320 = vunpack.c.l.b16 %v308
      %v321 = vunpack.c.l.b16 %v309
      %v322 = vunpack.c.l.b16 %v310
      %v323 = vpack.c.b16 %v320, %v319
      %v324 = vpack.c.b16 %v322, %v321
      %vm327 = vcmask 261120
      %v329 = vsel %vm327, %v299, 0
      %v332 = vsel %vm327, %v300, 0
      %v335 = vsel %vm327, %v301, 0
      %v338 = vsel %vm327, %v302, 0
      %v341 = vsel %vm327, %v303, 0
      %v344 = vsel %vm327, %v304, 0
      %v347 = vsel %vm327, %v305, 0
      %v350 = vsel %vm327, %v306, 0
      %352 = vmatpush.bf16.msra.mxu0 0
      %353 = vmatpush.bf16.msra.mxu0 0
      %354 = vmatpush.bf16.msra.mxu0 0
      %355 = vmatpush.bf16.msra.mxu0 0
      %356 = vmatpush.bf16.msra.mxu0 0
      %357 = vmatpush.bf16.msra.mxu0 0
      %358 = vmatpush.bf16.msra.mxu0 %v324
      %359 = vmatpush.bf16.msra.mxu0 %v323
      %360 = vmatmul.bf16.gmra.mxu0 %v329
      %v361 = vpop.f32.mrf.mxu0
      %v362 = vadd.f32 %v313, %v361
      %v363 = vpop.f32.mrf.mxu0
      %v364 = vadd.f32 %v313, %v363
      %365 = vmatmul.bf16.gmra.mxu0 %v332
      %v366 = vpop.f32.mrf.mxu0
      %v367 = vadd.f32 %v313, %v366
      %v368 = vpop.f32.mrf.mxu0
      %v369 = vadd.f32 %v313, %v368
      %370 = vmatmul.bf16.gmra.mxu0 %v335
      %v371 = vpop.f32.mrf.mxu0
      %v372 = vadd.f32 %v313, %v371
      %v373 = vpop.f32.mrf.mxu0
      %v374 = vadd.f32 %v313, %v373
      %375 = vmatmul.bf16.gmra.mxu0 %v338
      %v376 = vpop.f32.mrf.mxu0
      %v377 = vadd.f32 %v313, %v376
      %v378 = vpop.f32.mrf.mxu0
      %v379 = vadd.f32 %v313, %v378
      %380 = vmatmul.bf16.gmra.mxu0 %v341
      %v381 = vpop.f32.mrf.mxu0
      %v382 = vadd.f32 %v313, %v381
      %v383 = vpop.f32.mrf.mxu0
      %v384 = vadd.f32 %v313, %v383
      %385 = vmatmul.bf16.gmra.mxu0 %v344
      %v386 = vpop.f32.mrf.mxu0
      %v387 = vadd.f32 %v313, %v386
      %v388 = vpop.f32.mrf.mxu0
      %v389 = vadd.f32 %v313, %v388
      %390 = vmatmul.bf16.gmra.mxu0 %v347
      %v391 = vpop.f32.mrf.mxu0
      %v392 = vadd.f32 %v313, %v391
      %v393 = vpop.f32.mrf.mxu0
      %v394 = vadd.f32 %v313, %v393
      %395 = vmatmul.bf16.gmra.mxu0 %v350
      %v396 = vpop.f32.mrf.mxu0
      %v397 = vadd.f32 %v313, %v396
      %v398 = vpop.f32.mrf.mxu0
      %v399 = vadd.f32 %v313, %v398
      %400 = vdwg.mxu0
      %v401 = vmax.f32 %v362, 0.0
      %v402 = vmax.f32 %v364, 0.0
      %v403 = vmax.f32 %v367, 0.0
      %v404 = vmax.f32 %v369, 0.0
      %v405 = vmax.f32 %v372, 0.0
      %v406 = vmax.f32 %v374, 0.0
      %v407 = vmax.f32 %v377, 0.0
      %v408 = vmax.f32 %v379, 0.0
      %v409 = vmax.f32 %v382, 0.0
      %v410 = vmax.f32 %v384, 0.0
      %v411 = vmax.f32 %v387, 0.0
      %v412 = vmax.f32 %v389, 0.0
      %v413 = vmax.f32 %v392, 0.0
      %v414 = vmax.f32 %v394, 0.0
      %v415 = vmax.f32 %v397, 0.0
      %v416 = vmax.f32 %v399, 0.0
      %v417 = vpack.c.bf16 %v402, %v401
      %v418 = vpack.c.bf16 %v404, %v403
      %v419 = vpack.c.bf16 %v406, %v405
      %v420 = vpack.c.bf16 %v408, %v407
      %v421 = vpack.c.bf16 %v410, %v409
      %v422 = vpack.c.bf16 %v412, %v411
      %v423 = vpack.c.bf16 %v414, %v413
      %v424 = vpack.c.bf16 %v416, %v415
      %v425 = vld [vmem:[%s3] sm:$0xf]
      %v426 = vld [vmem:[%s3 + $0x4] sm:$0xf]
      %v427 = vld [vmem:[%s3 + $0x8] sm:$0xf]
      %v428 = vld [vmem:[%s3 + $0xc] sm:$0xf]
      %v429 = vld [vmem:[%s3 + $0x10] sm:$0xf]
      %v430 = vld [vmem:[%s3 + $0x14] sm:$0xf]
      %v431 = vld [vmem:[%s3 + $0x18] sm:$0xf]
      %v432 = vld [vmem:[%s3 + $0x1c] sm:$0xf]
      %v433 = vld [vmem:[%s4] sm:$0x1]
      %v435 = vperm.slane %v433, 0
      %v445 = vunpack.c.l.b16 %v425
      %v446 = vunpack.c.l.b16 %v426
      %v447 = vunpack.c.l.b16 %v427
      %v448 = vunpack.c.l.b16 %v428
      %v449 = vunpack.c.l.b16 %v429
      %v450 = vunpack.c.l.b16 %v430
      %v451 = vunpack.c.l.b16 %v431
      %v452 = vunpack.c.l.b16 %v432
      %v453 = vpack.c.b16 %v446, %v445
      %v454 = vpack.c.b16 %v448, %v447
      %v455 = vpack.c.b16 %v450, %v449
      %v456 = vpack.c.b16 %v452, %v451
      %vm461 = vcmask 523264
      %v463 = vsel %vm461, %v417, 0
      %v466 = vsel %vm461, %v418, 0
      %v469 = vsel %vm461, %v419, 0
      %v472 = vsel %vm461, %v420, 0
      %v475 = vsel %vm461, %v421, 0
      %v478 = vsel %vm461, %v422, 0
      %v481 = vsel %vm461, %v423, 0
      %v484 = vsel %vm461, %v424, 0
      %486 = vmatpush.bf16.msra.mxu0 0
      %487 = vmatpush.bf16.msra.mxu0 0
      %488 = vmatpush.bf16.msra.mxu0 0
      %489 = vmatpush.bf16.msra.mxu0 0
      %490 = vmatpush.bf16.msra.mxu0 %v456
      %491 = vmatpush.bf16.msra.mxu0 %v455
      %492 = vmatpush.bf16.msra.mxu0 %v454
      %493 = vmatpush.bf16.msra.mxu0 %v453
      %494 = vmatmul.bf16.gmra.mxu0 %v463
      %v495 = vpop.f32.mrf.mxu0
      %v496 = vadd.f32 %v435, %v495
      %v497 = vpop.f32.mrf.mxu0
      %v498 = vadd.f32 %v435, %v497
      %499 = vmatmul.bf16.gmra.mxu0 %v466
      %v500 = vpop.f32.mrf.mxu0
      %v501 = vadd.f32 %v435, %v500
      %v502 = vpop.f32.mrf.mxu0
      %v503 = vadd.f32 %v435, %v502
      %504 = vmatmul.bf16.gmra.mxu0 %v469
      %v505 = vpop.f32.mrf.mxu0
      %v506 = vadd.f32 %v435, %v505
      %v507 = vpop.f32.mrf.mxu0
      %v508 = vadd.f32 %v435, %v507
      %509 = vmatmul.bf16.gmra.mxu0 %v472
      %v510 = vpop.f32.mrf.mxu0
      %v511 = vadd.f32 %v435, %v510
      %v512 = vpop.f32.mrf.mxu0
      %v513 = vadd.f32 %v435, %v512
      %514 = vmatmul.bf16.gmra.mxu0 %v475
      %v515 = vpop.f32.mrf.mxu0
      %v516 = vadd.f32 %v435, %v515
      %v517 = vpop.f32.mrf.mxu0
      %v518 = vadd.f32 %v435, %v517
      %519 = vmatmul.bf16.gmra.mxu0 %v478
      %v520 = vpop.f32.mrf.mxu0
      %v521 = vadd.f32 %v435, %v520
      %v522 = vpop.f32.mrf.mxu0
      %v523 = vadd.f32 %v435, %v522
      %524 = vmatmul.bf16.gmra.mxu0 %v481
      %v525 = vpop.f32.mrf.mxu0
      %v526 = vadd.f32 %v435, %v525
      %v527 = vpop.f32.mrf.mxu0
      %v528 = vadd.f32 %v435, %v527
      %529 = vmatmul.bf16.gmra.mxu0 %v484
      %v530 = vpop.f32.mrf.mxu0
      %v531 = vadd.f32 %v435, %v530
      %v532 = vpop.f32.mrf.mxu0
      %v533 = vadd.f32 %v435, %v532
      %534 = vdwg.mxu0
      %v535 = vmax.f32 %v496, 0.0
      %v536 = vmax.f32 %v498, 0.0
      %v537 = vmax.f32 %v501, 0.0
      %v538 = vmax.f32 %v503, 0.0
      %v539 = vmax.f32 %v506, 0.0
      %v540 = vmax.f32 %v508, 0.0
      %v541 = vmax.f32 %v511, 0.0
      %v542 = vmax.f32 %v513, 0.0
      %v543 = vmax.f32 %v516, 0.0
      %v544 = vmax.f32 %v518, 0.0
      %v545 = vmax.f32 %v521, 0.0
      %v546 = vmax.f32 %v523, 0.0
      %v547 = vmax.f32 %v526, 0.0
      %v548 = vmax.f32 %v528, 0.0
      %v549 = vmax.f32 %v531, 0.0
      %v550 = vmax.f32 %v533, 0.0
      %v551 = vpack.c.bf16 %v536, %v535
      %v552 = vpack.c.bf16 %v538, %v537
      %v553 = vpack.c.bf16 %v540, %v539
      %v554 = vpack.c.bf16 %v542, %v541
      %v555 = vpack.c.bf16 %v544, %v543
      %v556 = vpack.c.bf16 %v546, %v545
      %v557 = vpack.c.bf16 %v548, %v547
      %v558 = vpack.c.bf16 %v550, %v549
      %v559 = vld [vmem:[%s5] sm:$0xf]
      %v560 = vld [vmem:[%s5 + $0x4] sm:$0xf]
      %v561 = vld [vmem:[%s5 + $0x8] sm:$0xf]
      %v562 = vld [vmem:[%s5 + $0xc] sm:$0xf]
      %v563 = vld [vmem:[%s5 + $0x10] sm:$0xf]
      %v564 = vld [vmem:[%s5 + $0x14] sm:$0xf]
      %v565 = vld [vmem:[%s6] sm:$0x1]
      %v567 = vperm.slane %v565, 0
      %v575 = vunpack.c.l.b16 %v559
      %v576 = vunpack.c.l.b16 %v560
      %v577 = vunpack.c.l.b16 %v561
      %v578 = vunpack.c.l.b16 %v562
      %v579 = vunpack.c.l.b16 %v563
      %v580 = vunpack.c.l.b16 %v564
      %v581 = vpack.c.b16 %v576, %v575
      %v582 = vpack.c.b16 %v578, %v577
      %v583 = vpack.c.b16 %v580, %v579
      %vm587 = vcmask 392192
      %v589 = vsel %vm587, %v551, 0
      %v592 = vsel %vm587, %v552, 0
      %v595 = vsel %vm587, %v553, 0
      %v598 = vsel %vm587, %v554, 0
      %v601 = vsel %vm587, %v555, 0
      %v604 = vsel %vm587, %v556, 0
      %v607 = vsel %vm587, %v557, 0
      %v610 = vsel %vm587, %v558, 0
      %612 = vmatpush.bf16.msra.mxu0 0
      %613 = vmatpush.bf16.msra.mxu0 0
      %614 = vmatpush.bf16.msra.mxu0 0
      %615 = vmatpush.bf16.msra.mxu0 0
      %616 = vmatpush.bf16.msra.mxu0 0
      %617 = vmatpush.bf16.msra.mxu0 %v583
      %618 = vmatpush.bf16.msra.mxu0 %v582
      %619 = vmatpush.bf16.msra.mxu0 %v581
      %620 = vmatmul.bf16.gmra.mxu0 %v589
      %v621 = vpop.f32.mrf.mxu0
      %v622 = vadd.f32 %v567, %v621
      %v623 = vpop.f32.mrf.mxu0
      %v624 = vadd.f32 %v567, %v623
      %625 = vmatmul.bf16.gmra.mxu0 %v592
      %v626 = vpop.f32.mrf.mxu0
      %v627 = vadd.f32 %v567, %v626
      %v628 = vpop.f32.mrf.mxu0
      %v629 = vadd.f32 %v567, %v628
      %630 = vmatmul.bf16.gmra.mxu0 %v595
      %v631 = vpop.f32.mrf.mxu0
      %v632 = vadd.f32 %v567, %v631
      %v633 = vpop.f32.mrf.mxu0
      %v634 = vadd.f32 %v567, %v633
      %635 = vmatmul.bf16.gmra.mxu0 %v598
      %v636 = vpop.f32.mrf.mxu0
      %v637 = vadd.f32 %v567, %v636
      %v638 = vpop.f32.mrf.mxu0
      %v639 = vadd.f32 %v567, %v638
      %640 = vmatmul.bf16.gmra.mxu0 %v601
      %v641 = vpop.f32.mrf.mxu0
      %v642 = vadd.f32 %v567, %v641
      %v643 = vpop.f32.mrf.mxu0
      %v644 = vadd.f32 %v567, %v643
      %645 = vmatmul.bf16.gmra.mxu0 %v604
      %v646 = vpop.f32.mrf.mxu0
      %v647 = vadd.f32 %v567, %v646
      %v648 = vpop.f32.mrf.mxu0
      %v649 = vadd.f32 %v567, %v648
      %650 = vmatmul.bf16.gmra.mxu0 %v607
      %v651 = vpop.f32.mrf.mxu0
      %v652 = vadd.f32 %v567, %v651
      %v653 = vpop.f32.mrf.mxu0
      %v654 = vadd.f32 %v567, %v653
      %655 = vmatmul.bf16.gmra.mxu0 %v610
      %v656 = vpop.f32.mrf.mxu0
      %v657 = vadd.f32 %v567, %v656
      %v658 = vpop.f32.mrf.mxu0
      %v659 = vadd.f32 %v567, %v658
      %660 = vdwg.mxu0
      %vm661 = vcmask 130048
      %662 = vst.msk [vmem:[%s280] sm:$0xff] %vm661, %v622
      %663 = vst.msk [vmem:[%s280 + $0x8] sm:$0xff] %vm661, %v624
      %664 = vst.msk [vmem:[%s280 + $0x10] sm:$0xff] %vm661, %v627
      %665 = vst.msk [vmem:[%s280 + $0x18] sm:$0xff] %vm661, %v629
      %666 = vst.msk [vmem:[%s280 + $0x20] sm:$0xff] %vm661, %v632
      %667 = vst.msk [vmem:[%s280 + $0x28] sm:$0xff] %vm661, %v634
      %668 = vst.msk [vmem:[%s280 + $0x30] sm:$0xff] %vm661, %v637
      %669 = vst.msk [vmem:[%s280 + $0x38] sm:$0xff] %vm661, %v639
      %670 = vst.msk [vmem:[%s280 + $0x40] sm:$0xff] %vm661, %v642
      %671 = vst.msk [vmem:[%s280 + $0x48] sm:$0xff] %vm661, %v644
      %672 = vst.msk [vmem:[%s280 + $0x50] sm:$0xff] %vm661, %v647
      %673 = vst.msk [vmem:[%s280 + $0x58] sm:$0xff] %vm661, %v649
      %674 = vst.msk [vmem:[%s280 + $0x60] sm:$0xff] %vm661, %v652
      %675 = vst.msk [vmem:[%s280 + $0x68] sm:$0xff] %vm661, %v654
      %676 = vst.msk [vmem:[%s280 + $0x70] sm:$0xff] %vm661, %v657
      %677 = vst.msk [vmem:[%s280 + $0x78] sm:$0xff] %vm661, %v659
      %s678 = smul.u32 16, %s18
      %p679 = scmp.lt.s32.totalorder %s678, 31
      %s680 = scalar_select %p679, %s678, 31
      %s681 = smul.addr %s680, 8
      %s682 = scalar_lea.vmem %s7, %s681
      // Predicated region
      $region49: #{tpu_custom_call.1} parent=47 // pred_check
        %p683 = pneg %p188
      $region50: #{tpu_custom_call.1} parent=47 // pred_check_branch
        %685 = sbr.rel (%p683) target = $region52
      $region51: #{tpu_custom_call.1} parent=47 // pred_region
        %s686 = smul.u32 16, %s18
      $region52: #{tpu_custom_call.1} parent=47 // pred_fallthru
        _
    $region48: #{tpu_custom_call.1} parent=5 // pred_fallthru
      _
    %p687 = scmp.le.s32.totalorder 2, %s13
    // Predicated region
    $region53: #{tpu_custom_call.1} parent=5 // pred_check
      %p688 = pneg %p687
    $region54: #{tpu_custom_call.1} parent=5 // pred_check_branch
      %690 = sbr.rel (%p688) target = $region56
    $region55: #{tpu_custom_call.1} parent=5 // pred_region
      %s691 = ssub.s32 %s13, 2
      // Predicated region
      $region57: #{tpu_custom_call.1} parent=55 // pred_check
        %p692 = pneg %p194
      $region58: #{tpu_custom_call.1} parent=55 // pred_check_branch
        %694 = sbr.rel (%p692) target = $region60
      $region59: #{tpu_custom_call.1} parent=55 // pred_region
        %s695 = smul.u32 16, %s19
        %p696 = scmp.lt.s32.totalorder %s695, 31
        %s697 = scalar_select %p696, %s695, 31
        %s698 = smul.addr %s697, 8
        %s699 = scalar_lea.vmem %s7, %s698
      $region60: #{tpu_custom_call.1} parent=55 // pred_fallthru
        _
    $region56: #{tpu_custom_call.1} parent=5 // pred_fallthru
      _
  $region6: #{tpu_custom_call.1} parent=0 // loop_footer
    %s17 = sadd.s32 1, %s13
  $region7: #{tpu_custom_call.1} parent=0 // loop_footer_branch
    %12 = sbr.rel target = $region3
  $region8: #{tpu_custom_call.1} parent=0 // loop_exit
    _

</llo_original>
